<compile_context>
chip_gen: v7x
topology: tpu7x:2x2x1
jax: 0.10.0
libtpu: 0.0.40
codegen_flags: <defaults>
</compile_context>

<pallas_src>
import functools

import jax
import jax.numpy as jnp
from jax.experimental import pallas as pl
from jax.experimental.pallas import tpu as pltpu


def _moe_router_kernel(x_ref, w1_ref, b1_ref, w2_ref, b2_ref, w3_ref, b3_ref,
                       logits_ref, weights_ref):
    """Fused router MLP + softmax on one (tm, D) batch tile.

    x_ref:   (tm, D)  f32   router input tile ([tk | aux])
    w1_ref:  (D, H1)  f32   b1_ref: (1, H1)
    w2_ref:  (H1,H2)  f32   b2_ref: (1, H2)
    w3_ref:  (H2, E)  f32   b3_ref: (1, E)
    logits_ref / weights_ref: (tm, E) f32
    """
    x = x_ref[...]

    # --- hidden layer 1 -----------------------------------------------------
    h1 = jnp.dot(x, w1_ref[...], preferred_element_type=jnp.float32)
    h1 = jnp.maximum(h1 + b1_ref[...], 0.0)

    # --- hidden layer 2 -----------------------------------------------------
    h2 = jnp.dot(h1, w2_ref[...], preferred_element_type=jnp.float32)
    h2 = jnp.maximum(h2 + b2_ref[...], 0.0)

    # --- expert logits ------------------------------------------------------
    logits = jnp.dot(h2, w3_ref[...], preferred_element_type=jnp.float32)
    logits = logits + b3_ref[...]

    # --- softmax over experts (exact divide) --------------------------------
    m = jnp.max(logits, axis=-1, keepdims=True)
    e = jnp.exp(logits - m)
    weights = e / jnp.sum(e, axis=-1, keepdims=True)

    logits_ref[...] = logits
    weights_ref[...] = weights


def _select_tile(batch, tm_max):
    """Pick a batch tile size: multiple of 8, large, and grid >= 2 when possible."""
    if batch <= 8:
        return batch                      # single full-extent block (legal)
    tm = min(tm_max, batch)
    tm = max(8, (tm // 8) * 8)
    if pl.cdiv(batch, tm) < 2:            # tm covered the whole batch ->
        half = ((-(-batch // 2)) + 7) // 8 * 8
        if 0 < half < batch:              # split into 2 tiles (pipelining /
            tm = half                     # v7x megacore)
    return tm


@functools.partial(jax.jit, static_argnames=("tm_max",))
def moe_router_forward(tk, aux, params, *, tm_max=1024):
    """
    Args:
      tk:  (B, 1)  float32 timestamps.
      aux: (B, A)  float32 auxiliary features, or None.
      params: dict with w1 (D, H1), b1 (1, H1), w2 (H1, H2), b2 (1, H2),
              w3 (H2, E), b3 (1, E); all float32.  D = 1 + A (or 1 if aux None).
      tm_max: upper bound on the batch tile size.

    Returns:
      (logits, weights), each (B, E) float32.
    """
    if aux is not None:
        x = jnp.concatenate([tk, aux], axis=-1).astype(jnp.float32)
    else:
        x = tk.astype(jnp.float32)

    B, D = x.shape
    if D != params["w1"].shape[0]:
        raise ValueError(
            f"Router input dimension mismatch. Expected {params['w1'].shape[0]}, got {D}.")
    E = params["w3"].shape[1]

    w1 = params["w1"].astype(jnp.float32)
    w2 = params["w2"].astype(jnp.float32)
    w3 = params["w3"].astype(jnp.float32)
    b1 = params["b1"].astype(jnp.float32)
    b2 = params["b2"].astype(jnp.float32)
    b3 = params["b3"].astype(jnp.float32)

    tm = _select_tile(B, tm_max)
    grid = (pl.cdiv(B, tm),)

    logits, weights = pl.pallas_call(
        _moe_router_kernel,
        out_shape=(jax.ShapeDtypeStruct((B, E), jnp.float32),
                   jax.ShapeDtypeStruct((B, E), jnp.float32)),
        grid=grid,
        in_specs=[
            pl.BlockSpec((tm, D), lambda i: (i, 0)),     # x: row-tiled
            pl.BlockSpec(w1.shape, lambda i: (0, 0)),    # weights: VMEM-resident
            pl.BlockSpec(b1.shape, lambda i: (0, 0)),
            pl.BlockSpec(w2.shape, lambda i: (0, 0)),
            pl.BlockSpec(b2.shape, lambda i: (0, 0)),
            pl.BlockSpec(w3.shape, lambda i: (0, 0)),
            pl.BlockSpec(b3.shape, lambda i: (0, 0)),
        ],
        out_specs=(pl.BlockSpec((tm, E), lambda i: (i, 0)),
                   pl.BlockSpec((tm, E), lambda i: (i, 0))),
        compiler_params=pltpu.CompilerParams(
            dimension_semantics=("parallel",)),          # both TCs on v7x
    )(x, w1, b1, w2, b2, w3, b3)

    return logits, weights


def init_params(key, input_dim, router_mlp_dims, num_experts):
    """Deterministic init mimicking nn.Linear (uniform +/- 1/sqrt(fan_in))."""
    dims = [input_dim] + list(router_mlp_dims) + [num_experts]
    params = {}
    names = ["1", "2", "3"]
    assert len(dims) - 1 == len(names)
    for i, n in enumerate(names):
        fan_in, fan_out = dims[i], dims[i + 1]
        key, kw, kb = jax.random.split(key, 3)
        bound = 1.0 / jnp.sqrt(jnp.float32(fan_in))
        params["w" + n] = jax.random.uniform(
            kw, (fan_in, fan_out), jnp.float32, -bound, bound)
        params["b" + n] = jax.random.uniform(
            kb, (1, fan_out), jnp.float32, -bound, bound)
    return params


if __name__ == "__main__":
    # Module-consistent shapes: tk (B,1), aux dim 7 -> input_dim = 8,
    # router_mlp_dims = (32, 32), num_experts = 4.  B=256 exercises the
    # batch-tiled grid (two 128-row tiles under the 2-step-minimum rule).
    B = 256
    AUX_DIM = 7
    INPUT_DIM = 1 + AUX_DIM
    ROUTER_MLP_DIMS = (32, 32)
    NUM_EXPERTS = 4

    key = jax.random.PRNGKey(0)
    key, k_tk, k_aux, k_par = jax.random.split(key, 4)

    tk = jax.random.uniform(k_tk, (B, 1), jnp.float32)
    aux = jax.random.normal(k_aux, (B, AUX_DIM), jnp.float32)
    params = init_params(k_par, INPUT_DIM, ROUTER_MLP_DIMS, NUM_EXPERTS)

    logits, weights = moe_router_forward(tk, aux, params)
    jax.block_until_ready((logits, weights))

    # Pure-JAX f32 reference (same math as the PyTorch module's forward).
    x = jnp.concatenate([tk, aux], axis=-1)
    h1 = jnp.maximum(jnp.dot(x, params["w1"]) + params["b1"], 0.0)
    h2 = jnp.maximum(jnp.dot(h1, params["w2"]) + params["b2"], 0.0)
    ref_logits = jnp.dot(h2, params["w3"]) + params["b3"]
    ref_weights = jax.nn.softmax(ref_logits, axis=-1)

    assert logits.shape == (B, NUM_EXPERTS) and weights.shape == (B, NUM_EXPERTS)
    assert bool(jnp.all(jnp.isfinite(logits))) and bool(jnp.all(jnp.isfinite(weights)))
    assert jnp.allclose(logits, ref_logits, atol=1e-4, rtol=1e-4)
    assert jnp.allclose(weights, ref_weights, atol=1e-4, rtol=1e-4)
    assert jnp.allclose(jnp.sum(weights, axis=-1), 1.0, atol=1e-5)

    print("KERNEL_OK")
</pallas_src>

<mosaic_0001>
module attributes {stable_mosaic.version = 11 : i64} {
  func.func @_moe_router_kernel(%arg0: i32, %arg1: memref<128x8xf32, #tpu.memory_space<vmem>>, %arg2: memref<8x32xf32, #tpu.memory_space<vmem>>, %arg3: memref<1x32xf32, #tpu.memory_space<vmem>>, %arg4: memref<32x32xf32, #tpu.memory_space<vmem>>, %arg5: memref<1x32xf32, #tpu.memory_space<vmem>>, %arg6: memref<32x4xf32, #tpu.memory_space<vmem>>, %arg7: memref<1x4xf32, #tpu.memory_space<vmem>>, %arg8: memref<128x4xf32, #tpu.memory_space<vmem>>, %arg9: memref<128x4xf32, #tpu.memory_space<vmem>>) attributes {dimension_semantics = [#tpu.dimension_semantics<parallel>], iteration_bounds = array<i64: 2>, scalar_prefetch = 0 : i64, scratch_operands = 0 : i64, tpu.core_type = #tpu.core_type<tc>, window_params = [{transform_indices = @transform_0, window_bounds = array<i64: 128, 8>}, {pipeline_mode = #tpu.pipeline_mode<synchronous>, transform_indices = @transform_1, window_bounds = array<i64: 8, 32>}, {pipeline_mode = #tpu.pipeline_mode<synchronous>, transform_indices = @transform_2, window_bounds = array<i64: 1, 32>}, {pipeline_mode = #tpu.pipeline_mode<synchronous>, transform_indices = @transform_3, window_bounds = array<i64: 32, 32>}, {pipeline_mode = #tpu.pipeline_mode<synchronous>, transform_indices = @transform_4, window_bounds = array<i64: 1, 32>}, {pipeline_mode = #tpu.pipeline_mode<synchronous>, transform_indices = @transform_5, window_bounds = array<i64: 32, 4>}, {pipeline_mode = #tpu.pipeline_mode<synchronous>, transform_indices = @transform_6, window_bounds = array<i64: 1, 4>}, {transform_indices = @transform_7, window_bounds = array<i64: 128, 4>}, {transform_indices = @transform_8, window_bounds = array<i64: 128, 4>}]} {
    %c0 = arith.constant 0 : index
    %c0_0 = arith.constant 0 : index
    %0 = vector.load %arg1[%c0, %c0_0] : memref<128x8xf32, #tpu.memory_space<vmem>>, vector<128x8xf32>
    %c0_1 = arith.constant 0 : index
    %c0_2 = arith.constant 0 : index
    %1 = vector.load %arg2[%c0_1, %c0_2] : memref<8x32xf32, #tpu.memory_space<vmem>>, vector<8x32xf32>
    %cst = arith.constant dense<0.000000e+00> : vector<128x32xf32>
    %2 = tpu.matmul %0, %1, %cst {dimension_numbers = #tpu.dot_dimension_numbers<[1], [0], [0], [1], [0, 0, 1, 1], [], []>} : vector<128x8xf32>, vector<8x32xf32>, vector<128x32xf32> -> vector<128x32xf32>
    %c0_3 = arith.constant 0 : index
    %c0_4 = arith.constant 0 : index
    %3 = vector.load %arg3[%c0_3, %c0_4] : memref<1x32xf32, #tpu.memory_space<vmem>>, vector<1x32xf32>
    %4 = vector.broadcast %3 : vector<1x32xf32> to vector<128x32xf32>
    %5 = arith.addf %2, %4 : vector<128x32xf32>
    %cst_5 = arith.constant 0.000000e+00 : f32
    %6 = vector.broadcast %cst_5 : f32 to vector<128x32xf32>
    %7 = arith.maximumf %5, %6 : vector<128x32xf32>
    %c0_6 = arith.constant 0 : index
    %c0_7 = arith.constant 0 : index
    %8 = vector.load %arg4[%c0_6, %c0_7] : memref<32x32xf32, #tpu.memory_space<vmem>>, vector<32x32xf32>
    %cst_8 = arith.constant dense<0.000000e+00> : vector<128x32xf32>
    %9 = tpu.matmul %7, %8, %cst_8 {dimension_numbers = #tpu.dot_dimension_numbers<[1], [0], [0], [1], [0, 0, 1, 1], [], []>} : vector<128x32xf32>, vector<32x32xf32>, vector<128x32xf32> -> vector<128x32xf32>
    %c0_9 = arith.constant 0 : index
    %c0_10 = arith.constant 0 : index
    %10 = vector.load %arg5[%c0_9, %c0_10] : memref<1x32xf32, #tpu.memory_space<vmem>>, vector<1x32xf32>
    %11 = vector.broadcast %10 : vector<1x32xf32> to vector<128x32xf32>
    %12 = arith.addf %9, %11 : vector<128x32xf32>
    %cst_11 = arith.constant 0.000000e+00 : f32
    %13 = vector.broadcast %cst_11 : f32 to vector<128x32xf32>
    %14 = arith.maximumf %12, %13 : vector<128x32xf32>
    %c0_12 = arith.constant 0 : index
    %c0_13 = arith.constant 0 : index
    %15 = vector.load %arg6[%c0_12, %c0_13] : memref<32x4xf32, #tpu.memory_space<vmem>>, vector<32x4xf32>
    %cst_14 = arith.constant dense<0.000000e+00> : vector<128x4xf32>
    %16 = tpu.matmul %14, %15, %cst_14 {dimension_numbers = #tpu.dot_dimension_numbers<[1], [0], [0], [1], [0, 0, 1, 1], [], []>} : vector<128x32xf32>, vector<32x4xf32>, vector<128x4xf32> -> vector<128x4xf32>
    %c0_15 = arith.constant 0 : index
    %c0_16 = arith.constant 0 : index
    %17 = vector.load %arg7[%c0_15, %c0_16] : memref<1x4xf32, #tpu.memory_space<vmem>>, vector<1x4xf32>
    %18 = vector.broadcast %17 : vector<1x4xf32> to vector<128x4xf32>
    %19 = arith.addf %16, %18 : vector<128x4xf32>
    %cst_17 = arith.constant dense<0xFF800000> : vector<128xf32>
    %20 = vector.multi_reduction <maximumf>, %19, %cst_17 [1] : vector<128x4xf32> to vector<128xf32>
    %21 = vector.shape_cast %20 : vector<128xf32> to vector<128x1xf32>
    %22 = vector.broadcast %21 : vector<128x1xf32> to vector<128x4xf32>
    %23 = arith.subf %19, %22 : vector<128x4xf32>
    %24 = math.exp %23 : vector<128x4xf32>
    %cst_18 = arith.constant dense<0.000000e+00> : vector<128xf32>
    %25 = vector.multi_reduction <add>, %24, %cst_18 [1] : vector<128x4xf32> to vector<128xf32>
    %26 = vector.shape_cast %25 : vector<128xf32> to vector<128x1xf32>
    %27 = vector.broadcast %26 : vector<128x1xf32> to vector<128x4xf32>
    %28 = arith.divf %24, %27 : vector<128x4xf32>
    %c0_19 = arith.constant 0 : index
    %c0_20 = arith.constant 0 : index
    %29 = vector.load %arg8[%c0_19, %c0_20] : memref<128x4xf32, #tpu.memory_space<vmem>>, vector<128x4xf32>
    tpu.vector_store %arg8[%c0_19, %c0_20], %19 {strides = array<i32>} : memref<128x4xf32, #tpu.memory_space<vmem>>, vector<128x4xf32>,
    %c0_21 = arith.constant 0 : index
    %c0_22 = arith.constant 0 : index
    %30 = vector.load %arg9[%c0_21, %c0_22] : memref<128x4xf32, #tpu.memory_space<vmem>>, vector<128x4xf32>
    tpu.vector_store %arg9[%c0_21, %c0_22], %28 {strides = array<i32>} : memref<128x4xf32, #tpu.memory_space<vmem>>, vector<128x4xf32>,
    return
  }
  func.func @transform_0(%arg0: i32) -> (i32, i32) {
    %c0_i32 = arith.constant 0 : i32
    %c0_i32_0 = arith.constant 0 : i32
    return %arg0, %c0_i32 : i32, i32
  }
  func.func @transform_1(%arg0: i32) -> (i32, i32) {
    %c0_i32 = arith.constant 0 : i32
    %c0_i32_0 = arith.constant 0 : i32
    %c0_i32_1 = arith.constant 0 : i32
    return %c0_i32, %c0_i32_0 : i32, i32
  }
  func.func @transform_2(%arg0: i32) -> (i32, i32) {
    %c0_i32 = arith.constant 0 : i32
    %c0_i32_0 = arith.constant 0 : i32
    %c0_i32_1 = arith.constant 0 : i32
    return %c0_i32, %c0_i32_0 : i32, i32
  }
  func.func @transform_3(%arg0: i32) -> (i32, i32) {
    %c0_i32 = arith.constant 0 : i32
    %c0_i32_0 = arith.constant 0 : i32
    %c0_i32_1 = arith.constant 0 : i32
    return %c0_i32, %c0_i32_0 : i32, i32
  }
  func.func @transform_4(%arg0: i32) -> (i32, i32) {
    %c0_i32 = arith.constant 0 : i32
    %c0_i32_0 = arith.constant 0 : i32
    %c0_i32_1 = arith.constant 0 : i32
    return %c0_i32, %c0_i32_0 : i32, i32
  }
  func.func @transform_5(%arg0: i32) -> (i32, i32) {
    %c0_i32 = arith.constant 0 : i32
    %c0_i32_0 = arith.constant 0 : i32
    %c0_i32_1 = arith.constant 0 : i32
    return %c0_i32, %c0_i32_0 : i32, i32
  }
  func.func @transform_6(%arg0: i32) -> (i32, i32) {
    %c0_i32 = arith.constant 0 : i32
    %c0_i32_0 = arith.constant 0 : i32
    %c0_i32_1 = arith.constant 0 : i32
    return %c0_i32, %c0_i32_0 : i32, i32
  }
  func.func @transform_7(%arg0: i32) -> (i32, i32) {
    %c0_i32 = arith.constant 0 : i32
    %c0_i32_0 = arith.constant 0 : i32
    return %arg0, %c0_i32 : i32, i32
  }
  func.func @transform_8(%arg0: i32) -> (i32, i32) {
    %c0_i32 = arith.constant 0 : i32
    %c0_i32_0 = arith.constant 0 : i32
    return %arg0, %c0_i32 : i32, i32
  }
}

</mosaic_0001>

<llo_original>
// kernel: moe_router_forward.1
$region0: #{moe_router_forward.1}
  #allocation0 [shape = 'u32[]', space=smem, size = 0x4, offset = 0x4, fixed_abs, tag = 'smem constant byte address 0x4 - core index']
  #allocation1 [shape = 'u32[144,128]{1,0:T(1,128)}', space=vmem, size = 0x12000, scoped, tag = 'internal scratch']
  %s0 = inlined_call_operand.vmem [shape: f32[256,8], index: 0, kind: input, shape index: {}]
  %s1 = inlined_call_operand.vmem [shape: f32[8,32], index: 1, kind: input, shape index: {}]
  %s2 = inlined_call_operand.vmem [shape: f32[1,32], index: 2, kind: input, shape index: {}]
  %s3 = inlined_call_operand.vmem [shape: f32[32,32], index: 3, kind: input, shape index: {}]
  %s4 = inlined_call_operand.vmem [shape: f32[1,32], index: 4, kind: input, shape index: {}]
  %s5 = inlined_call_operand.vmem [shape: f32[32,4], index: 5, kind: input, shape index: {}]
  %s6 = inlined_call_operand.vmem [shape: f32[1,4], index: 6, kind: input, shape index: {}]
  %s7 = inlined_call_operand.vmem [shape: f32[256,4], index: 7, kind: output, shape index: {0}]
  %s8 = inlined_call_operand.vmem [shape: f32[256,4], index: 8, kind: output, shape index: {1}]
  %9 = xla_tuple %s7, %s8
  %s10 = sld [smem:[#allocation0]]
  $region69: #{moe_router_forward.1} parent=0
    _
  %s12 = ssub.s32 1, %s10
  %s13 = scalar_select 0, %s12, %s10
  loop: start=0, step=1, limit=4
  $region2: #{moe_router_forward.1} parent=0 // loop_pre_header
    _
  $region3: #{moe_router_forward.1} parent=0 // loop_header
    %s15 = sphi 0, %s19
    %p16 = scmp.ge.s32.totalorder %s15, 4
    %s25 = sphi 0, %s27
    %s28 = sphi 0, %s25
    %s29 = sphi 0, %s28
    %s45 = sphi 0, %s29
    %s49 = sphi 0, %s49
    %s51 = sphi 0, %s49
    %s52 = sphi 0, %s51
    %s66 = sphi 0, %s52
    %s70 = sphi 0, %s70
    %s72 = sphi 0, %s70
    %s73 = sphi 0, %s72
    %s87 = sphi 0, %s73
    %s91 = sphi 0, %s91
    %s93 = sphi 0, %s91
    %s94 = sphi 0, %s93
    %s108 = sphi 0, %s94
    %s112 = sphi 0, %s112
    %s114 = sphi 0, %s112
    %s115 = sphi 0, %s114
    %s129 = sphi 0, %s115
    %s133 = sphi 0, %s133
    %s135 = sphi 0, %s133
    %s136 = sphi 0, %s135
    %s150 = sphi 0, %s136
    %s154 = sphi 0, %s154
    %s156 = sphi 0, %s154
    %s157 = sphi 0, %s156
    %s171 = sphi 0, %s157
    %s177 = sphi 0, %s179
    %s180 = sphi 0, %s177
    %s181 = sphi 0, %s180
    %s197 = sphi 0, %s181
    %s203 = sphi 0, %s205
    %s206 = sphi 0, %s203
    %s207 = sphi 0, %s206
    %s223 = sphi 0, %s207
  $region4: #{moe_router_forward.1} parent=0 // loop_header_branch
    %18 = sbr.rel (%p16) target = $region8
  $region5: #{moe_router_forward.1} parent=0 // loop_body
    %s20 = ssub.s32 %s15, 1
    %s21 = ssub.s32 %s15, 2
    %s22 = sadd.s32 %s15, 1
    %s23 = ssub.s32 %s15, %s22
    %p24 = scmp.eq.s32.totalorder %s23, 0
    %s26 = sadd.s32 %s25, 1
    %s27 = scalar_select %p24, %s25, %s26
    %p30 = pneg %p24
    %p31 = scmp.eq.s32.totalorder %s15, 1
    %p32 = por %p30, %p31
    %p33 = scmp.ne.s32.totalorder %s25, %s28
    %p34 = scmp.eq.s32.totalorder %s15, 0
    %p35 = por %p33, %p34
    %p36 = scmp.ne.s32.totalorder %s25, %s28
    %p37 = scmp.eq.s32.totalorder %s20, 1
    %p38 = por %p36, %p37
    %p39 = scmp.ne.s32.totalorder %s28, %s29
    %p40 = scmp.eq.s32.totalorder %s20, 0
    %p41 = por %p39, %p40
    %p42 = scmp.ne.s32.totalorder %s28, %s29
    %p43 = scmp.eq.s32.totalorder %s21, 1
    %p44 = por %p42, %p43
    %p46 = scmp.ne.s32.totalorder %s29, %s45
    %p47 = scmp.eq.s32.totalorder %s21, 0
    %p48 = por %p46, %p47
    %s50 = sadd.s32 %s49, 1
    %p53 = scmp.eq.s32.totalorder %s15, 1
    %p54 = scmp.ne.s32.totalorder %s49, %s51
    %p55 = scmp.eq.s32.totalorder %s15, 0
    %p56 = por %p54, %p55
    %p57 = scmp.ne.s32.totalorder %s49, %s51
    %p58 = scmp.eq.s32.totalorder %s20, 1
    %p59 = por %p57, %p58
    %p60 = scmp.ne.s32.totalorder %s51, %s52
    %p61 = scmp.eq.s32.totalorder %s20, 0
    %p62 = por %p60, %p61
    %p63 = scmp.ne.s32.totalorder %s51, %s52
    %p64 = scmp.eq.s32.totalorder %s21, 1
    %p65 = por %p63, %p64
    %p67 = scmp.ne.s32.totalorder %s52, %s66
    %p68 = scmp.eq.s32.totalorder %s21, 0
    %p69 = por %p67, %p68
    %s71 = sadd.s32 %s70, 1
    %p74 = scmp.eq.s32.totalorder %s15, 1
    %p75 = scmp.ne.s32.totalorder %s70, %s72
    %p76 = scmp.eq.s32.totalorder %s15, 0
    %p77 = por %p75, %p76
    %p78 = scmp.ne.s32.totalorder %s70, %s72
    %p79 = scmp.eq.s32.totalorder %s20, 1
    %p80 = por %p78, %p79
    %p81 = scmp.ne.s32.totalorder %s72, %s73
    %p82 = scmp.eq.s32.totalorder %s20, 0
    %p83 = por %p81, %p82
    %p84 = scmp.ne.s32.totalorder %s72, %s73
    %p85 = scmp.eq.s32.totalorder %s21, 1
    %p86 = por %p84, %p85
    %p88 = scmp.ne.s32.totalorder %s73, %s87
    %p89 = scmp.eq.s32.totalorder %s21, 0
    %p90 = por %p88, %p89
    %s92 = sadd.s32 %s91, 1
    %p95 = scmp.eq.s32.totalorder %s15, 1
    %p96 = scmp.ne.s32.totalorder %s91, %s93
    %p97 = scmp.eq.s32.totalorder %s15, 0
    %p98 = por %p96, %p97
    %p99 = scmp.ne.s32.totalorder %s91, %s93
    %p100 = scmp.eq.s32.totalorder %s20, 1
    %p101 = por %p99, %p100
    %p102 = scmp.ne.s32.totalorder %s93, %s94
    %p103 = scmp.eq.s32.totalorder %s20, 0
    %p104 = por %p102, %p103
    %p105 = scmp.ne.s32.totalorder %s93, %s94
    %p106 = scmp.eq.s32.totalorder %s21, 1
    %p107 = por %p105, %p106
    %p109 = scmp.ne.s32.totalorder %s94, %s108
    %p110 = scmp.eq.s32.totalorder %s21, 0
    %p111 = por %p109, %p110
    %s113 = sadd.s32 %s112, 1
    %p116 = scmp.eq.s32.totalorder %s15, 1
    %p117 = scmp.ne.s32.totalorder %s112, %s114
    %p118 = scmp.eq.s32.totalorder %s15, 0
    %p119 = por %p117, %p118
    %p120 = scmp.ne.s32.totalorder %s112, %s114
    %p121 = scmp.eq.s32.totalorder %s20, 1
    %p122 = por %p120, %p121
    %p123 = scmp.ne.s32.totalorder %s114, %s115
    %p124 = scmp.eq.s32.totalorder %s20, 0
    %p125 = por %p123, %p124
    %p126 = scmp.ne.s32.totalorder %s114, %s115
    %p127 = scmp.eq.s32.totalorder %s21, 1
    %p128 = por %p126, %p127
    %p130 = scmp.ne.s32.totalorder %s115, %s129
    %p131 = scmp.eq.s32.totalorder %s21, 0
    %p132 = por %p130, %p131
    %s134 = sadd.s32 %s133, 1
    %p137 = scmp.eq.s32.totalorder %s15, 1
    %p138 = scmp.ne.s32.totalorder %s133, %s135
    %p139 = scmp.eq.s32.totalorder %s15, 0
    %p140 = por %p138, %p139
    %p141 = scmp.ne.s32.totalorder %s133, %s135
    %p142 = scmp.eq.s32.totalorder %s20, 1
    %p143 = por %p141, %p142
    %p144 = scmp.ne.s32.totalorder %s135, %s136
    %p145 = scmp.eq.s32.totalorder %s20, 0
    %p146 = por %p144, %p145
    %p147 = scmp.ne.s32.totalorder %s135, %s136
    %p148 = scmp.eq.s32.totalorder %s21, 1
    %p149 = por %p147, %p148
    %p151 = scmp.ne.s32.totalorder %s136, %s150
    %p152 = scmp.eq.s32.totalorder %s21, 0
    %p153 = por %p151, %p152
    %s155 = sadd.s32 %s154, 1
    %p158 = scmp.eq.s32.totalorder %s15, 1
    %p159 = scmp.ne.s32.totalorder %s154, %s156
    %p160 = scmp.eq.s32.totalorder %s15, 0
    %p161 = por %p159, %p160
    %p162 = scmp.ne.s32.totalorder %s154, %s156
    %p163 = scmp.eq.s32.totalorder %s20, 1
    %p164 = por %p162, %p163
    %p165 = scmp.ne.s32.totalorder %s156, %s157
    %p166 = scmp.eq.s32.totalorder %s20, 0
    %p167 = por %p165, %p166
    %p168 = scmp.ne.s32.totalorder %s156, %s157
    %p169 = scmp.eq.s32.totalorder %s21, 1
    %p170 = por %p168, %p169
    %p172 = scmp.ne.s32.totalorder %s157, %s171
    %p173 = scmp.eq.s32.totalorder %s21, 0
    %p174 = por %p172, %p173
    %s175 = ssub.s32 %s15, %s22
    %p176 = scmp.eq.s32.totalorder %s175, 0
    %s178 = sadd.s32 %s177, 1
    %s179 = scalar_select %p176, %s177, %s178
    %p182 = pneg %p176
    %p183 = scmp.eq.s32.totalorder %s15, 1
    %p184 = por %p182, %p183
    %p185 = scmp.ne.s32.totalorder %s177, %s180
    %p186 = scmp.eq.s32.totalorder %s15, 0
    %p187 = por %p185, %p186
    %p188 = scmp.ne.s32.totalorder %s177, %s180
    %p189 = scmp.eq.s32.totalorder %s20, 1
    %p190 = por %p188, %p189
    %p191 = scmp.ne.s32.totalorder %s180, %s181
    %p192 = scmp.eq.s32.totalorder %s20, 0
    %p193 = por %p191, %p192
    %p194 = scmp.ne.s32.totalorder %s180, %s181
    %p195 = scmp.eq.s32.totalorder %s21, 1
    %p196 = por %p194, %p195
    %p198 = scmp.ne.s32.totalorder %s181, %s197
    %p199 = scmp.eq.s32.totalorder %s21, 0
    %p200 = por %p198, %p199
    %s201 = ssub.s32 %s15, %s22
    %p202 = scmp.eq.s32.totalorder %s201, 0
    %s204 = sadd.s32 %s203, 1
    %s205 = scalar_select %p202, %s203, %s204
    %p208 = pneg %p202
    %p209 = scmp.eq.s32.totalorder %s15, 1
    %p210 = por %p208, %p209
    %p211 = scmp.ne.s32.totalorder %s203, %s206
    %p212 = scmp.eq.s32.totalorder %s15, 0
    %p213 = por %p211, %p212
    %p214 = scmp.ne.s32.totalorder %s203, %s206
    %p215 = scmp.eq.s32.totalorder %s20, 1
    %p216 = por %p214, %p215
    %p217 = scmp.ne.s32.totalorder %s206, %s207
    %p218 = scmp.eq.s32.totalorder %s20, 0
    %p219 = por %p217, %p218
    %p220 = scmp.ne.s32.totalorder %s206, %s207
    %p221 = scmp.eq.s32.totalorder %s21, 1
    %p222 = por %p220, %p221
    %p224 = scmp.ne.s32.totalorder %s207, %s223
    %p225 = scmp.eq.s32.totalorder %s21, 0
    %p226 = por %p224, %p225
    %p227 = scmp.le.s32.totalorder 1, %s15
    %p228 = scmp.lt.s32.totalorder %s15, 3
    %p229 = pnand %p227, %p228
    %p230 = pneg %p229
    // Predicated region
    $region9: #{moe_router_forward.1} parent=5 // pred_check
      _
    $region10: #{moe_router_forward.1} parent=5 // pred_check_branch
      %232 = sbr.rel (%p229) target = $region12
    $region11: #{moe_router_forward.1} parent=5 // pred_region
      %s233 = ssub.s32 %s15, 1
      // Predicated region
      $region13: #{moe_router_forward.1} parent=11 // pred_check
        %p234 = pneg %p62
      $region14: #{moe_router_forward.1} parent=11 // pred_check_branch
        %236 = sbr.rel (%p234) target = $region16
      $region15: #{moe_router_forward.1} parent=11 // pred_region
        _
      $region16: #{moe_router_forward.1} parent=11 // pred_fallthru
        _
      // Predicated region
      $region17: #{moe_router_forward.1} parent=11 // pred_check
        %p237 = pneg %p83
      $region18: #{moe_router_forward.1} parent=11 // pred_check_branch
        %239 = sbr.rel (%p237) target = $region20
      $region19: #{moe_router_forward.1} parent=11 // pred_region
        _
      $region20: #{moe_router_forward.1} parent=11 // pred_fallthru
        _
      // Predicated region
      $region21: #{moe_router_forward.1} parent=11 // pred_check
        %p240 = pneg %p104
      $region22: #{moe_router_forward.1} parent=11 // pred_check_branch
        %242 = sbr.rel (%p240) target = $region24
      $region23: #{moe_router_forward.1} parent=11 // pred_region
        _
      $region24: #{moe_router_forward.1} parent=11 // pred_fallthru
        _
      // Predicated region
      $region25: #{moe_router_forward.1} parent=11 // pred_check
        %p243 = pneg %p125
      $region26: #{moe_router_forward.1} parent=11 // pred_check_branch
        %245 = sbr.rel (%p243) target = $region28
      $region27: #{moe_router_forward.1} parent=11 // pred_region
        _
      $region28: #{moe_router_forward.1} parent=11 // pred_fallthru
        _
      // Predicated region
      $region29: #{moe_router_forward.1} parent=11 // pred_check
        %p246 = pneg %p146
      $region30: #{moe_router_forward.1} parent=11 // pred_check_branch
        %248 = sbr.rel (%p246) target = $region32
      $region31: #{moe_router_forward.1} parent=11 // pred_region
        _
      $region32: #{moe_router_forward.1} parent=11 // pred_fallthru
        _
      // Predicated region
      $region33: #{moe_router_forward.1} parent=11 // pred_check
        %p249 = pneg %p167
      $region34: #{moe_router_forward.1} parent=11 // pred_check_branch
        %251 = sbr.rel (%p249) target = $region36
      $region35: #{moe_router_forward.1} parent=11 // pred_region
        _
      $region36: #{moe_router_forward.1} parent=11 // pred_fallthru
        _
    $region12: #{moe_router_forward.1} parent=5 // pred_fallthru
      _
    %p252 = scmp.lt.s32.totalorder %s15, 2
    // Predicated region
    $region37: #{moe_router_forward.1} parent=5 // pred_check
      %p253 = pneg %p252
    $region38: #{moe_router_forward.1} parent=5 // pred_check_branch
      %255 = sbr.rel (%p253) target = $region40
    $region39: #{moe_router_forward.1} parent=5 // pred_region
      // Predicated region
      $region41: #{moe_router_forward.1} parent=39 // pred_check
        %p256 = pneg %p35
      $region42: #{moe_router_forward.1} parent=39 // pred_check_branch
        %258 = sbr.rel (%p256) target = $region44
      $region43: #{moe_router_forward.1} parent=39 // pred_region
        %s259 = smul.u32 16, %s15
        %p260 = scmp.lt.s32.totalorder %s259, 31
        %s261 = scalar_select %p260, %s259, 31
        %s262 = smul.addr %s261, 8
        %s263 = scalar_lea.vmem %s0, %s262
        %s264 = smul.u32 16, %s15
      $region44: #{moe_router_forward.1} parent=39 // pred_fallthru
        _
    $region40: #{moe_router_forward.1} parent=5 // pred_fallthru
      _
    %p265 = scmp.le.s32.totalorder 1, %s15
    %p266 = scmp.lt.s32.totalorder %s15, 3
    %p267 = pnand %p265, %p266
    %p268 = pneg %p267
    // Predicated region
    $region45: #{moe_router_forward.1} parent=5 // pred_check
      _
    $region46: #{moe_router_forward.1} parent=5 // pred_check_branch
      %270 = sbr.rel (%p267) target = $region48
    $region47: #{moe_router_forward.1} parent=5 // pred_region
      %s271 = ssub.s32 %s15, 1
      %s272 = smul.u32 16, %s20
      %p273 = scmp.lt.s32.totalorder %s272, 31
      %s274 = scalar_select %p273, %s272, 31
      %s275 = smul.addr %s274, 8
      %s276 = scalar_lea.vmem %s0, %s275
      %p277 = pneg %p41
      %p278 = pneg %p38
      %p279 = pneg %p62
      %p280 = pneg %p59
      %p281 = pneg %p83
      %p282 = pneg %p80
      %p283 = pneg %p104
      %p284 = pneg %p101
      %p285 = pneg %p125
      %p286 = pneg %p122
      %p287 = pneg %p146
      %p288 = pneg %p143
      %p289 = pneg %p167
      %p290 = pneg %p164
      %p291 = pneg %p193
      %p292 = pneg %p190
      %s293 = smul.u32 16, %s20
      %p294 = scmp.lt.s32.totalorder %s293, 31
      %s295 = scalar_select %p294, %s293, 31
      %s296 = smul.addr %s295, 8
      %s297 = scalar_lea.vmem %s7, %s296
      %p298 = pneg %p219
      %p299 = pneg %p216
      %s300 = smul.u32 16, %s20
      %p301 = scmp.lt.s32.totalorder %s300, 31
      %s302 = scalar_select %p301, %s300, 31
      %s303 = smul.addr %s302, 8
      %s304 = scalar_lea.vmem %s8, %s303
      %s305 = smul.u32 16, %s20
      %p306 = scmp.lt.s32.totalorder %s305, 31
      %s307 = scalar_select %p306, %s305, 31
      %s308 = smul.addr %s307, 8
      %s309 = scalar_lea.vmem %s0, %s308
      %s310 = smul.u32 16, %s20
      %s311 = smul.u32 16, %s20
      %p312 = scmp.lt.s32.totalorder %s311, 31
      %s313 = scalar_select %p312, %s311, 31
      %s314 = smul.addr %s313, 8
      %s315 = scalar_lea.vmem %s7, %s314
      %s316 = smul.u32 16, %s20
      %s317 = smul.u32 16, %s20
      %p318 = scmp.lt.s32.totalorder %s317, 31
      %s319 = scalar_select %p318, %s317, 31
      %s320 = smul.addr %s319, 8
      %s321 = scalar_lea.vmem %s8, %s320
      %s322 = smul.u32 16, %s20
      %v323 = vld [vmem:[%s309] sm:$0xff]
      %v324 = vld [vmem:[%s309 + $0x8] sm:$0xff]
      %v325 = vld [vmem:[%s309 + $0x10] sm:$0xff]
      %v326 = vld [vmem:[%s309 + $0x18] sm:$0xff]
      %v327 = vld [vmem:[%s309 + $0x20] sm:$0xff]
      %v328 = vld [vmem:[%s309 + $0x28] sm:$0xff]
      %v329 = vld [vmem:[%s309 + $0x30] sm:$0xff]
      %v330 = vld [vmem:[%s309 + $0x38] sm:$0xff]
      %v331 = vld [vmem:[%s309 + $0x40] sm:$0xff]
      %v332 = vld [vmem:[%s309 + $0x48] sm:$0xff]
      %v333 = vld [vmem:[%s309 + $0x50] sm:$0xff]
      %v334 = vld [vmem:[%s309 + $0x58] sm:$0xff]
      %v335 = vld [vmem:[%s309 + $0x60] sm:$0xff]
      %v336 = vld [vmem:[%s309 + $0x68] sm:$0xff]
      %v337 = vld [vmem:[%s309 + $0x70] sm:$0xff]
      %v338 = vld [vmem:[%s309 + $0x78] sm:$0xff]
      %v339 = vld [vmem:[%s1] sm:$0xff]
      %v340 = vld [vmem:[%s2] sm:$0x1]
      %v342 = vlaneseq
      %v343 = vshrl.u32 %v342, 7
      %v344 = vsub.s32 0, %v343
      %v345 = vrot.slane %v340, %v344
      %vm347 = vcmask 64512
      %v349 = vsel %vm347, %v323, 0
      %v352 = vsel %vm347, %v324, 0
      %v355 = vsel %vm347, %v325, 0
      %v358 = vsel %vm347, %v326, 0
      %v361 = vsel %vm347, %v327, 0
      %v364 = vsel %vm347, %v328, 0
      %v367 = vsel %vm347, %v329, 0
      %v370 = vsel %vm347, %v330, 0
      %v373 = vsel %vm347, %v331, 0
      %v376 = vsel %vm347, %v332, 0
      %v379 = vsel %vm347, %v333, 0
      %v382 = vsel %vm347, %v334, 0
      %v385 = vsel %vm347, %v335, 0
      %v388 = vsel %vm347, %v336, 0
      %v391 = vsel %vm347, %v337, 0
      %v394 = vsel %vm347, %v338, 0
      %396 = vmatprep.subr.mxu0 0.0
      %397 = vmatpush1.msra.mxu0 %v339
      %398 = vmatprep.subr.mxu0 0.0
      %399 = vmatpush1.msra.mxu0 0.0
      %400 = vmatprep.subr.mxu0 0.0
      %401 = vmatpush1.msra.mxu0 0.0
      %402 = vmatprep.subr.mxu0 0.0
      %403 = vmatpush1.msra.mxu0 0.0
      %404 = vmatprep.subr.mxu0 0.0
      %405 = vmatpush1.msra.mxu0 0.0
      %406 = vmatprep.subr.mxu0 0.0
      %407 = vmatpush1.msra.mxu0 0.0
      %408 = vmatprep.subr.mxu0 0.0
      %409 = vmatpush1.msra.mxu0 0.0
      %410 = vmatprep.subr.mxu0 0.0
      %411 = vmatpush1.msra.mxu0 0.0
      %412 = vmatprep.subr.mxu0 0.0
      %413 = vmatpush1.msra.mxu0 0.0
      %414 = vmatprep.subr.mxu0 0.0
      %415 = vmatpush1.msra.mxu0 0.0
      %416 = vmatprep.subr.mxu0 0.0
      %417 = vmatpush1.msra.mxu0 0.0
      %418 = vmatprep.subr.mxu0 0.0
      %419 = vmatpush1.msra.mxu0 0.0
      %420 = vmatprep.subr.mxu0 0.0
      %421 = vmatpush1.msra.mxu0 0.0
      %422 = vmatprep.subr.mxu0 0.0
      %423 = vmatpush1.msra.mxu0 0.0
      %424 = vmatprep.subr.mxu0 0.0
      %425 = vmatpush1.msra.mxu0 0.0
      %426 = vmatprep.subr.mxu0 0.0
      %427 = vmatpush1.msra.mxu0 0.0
      %428 = vmatprep.subr.mxu0 0.0
      %429 = vmatpush1.msra.mxu0 0.0
      %430 = vmatprep.subr.mxu0 0.0
      %431 = vmatpush1.msra.mxu0 0.0
      %432 = vmatprep.subr.mxu0 0.0
      %433 = vmatpush1.msra.mxu0 0.0
      %434 = vmatprep.subr.mxu0 0.0
      %435 = vmatpush1.msra.mxu0 0.0
      %436 = vmatprep.subr.mxu0 0.0
      %437 = vmatpush1.msra.mxu0 0.0
      %438 = vmatprep.subr.mxu0 0.0
      %439 = vmatpush1.msra.mxu0 0.0
      %440 = vmatprep.subr.mxu0 0.0
      %441 = vmatpush1.msra.mxu0 0.0
      %442 = vmatprep.subr.mxu0 0.0
      %443 = vmatpush1.msra.mxu0 0.0
      %444 = vmatprep.subr.mxu0 0.0
      %445 = vmatpush1.msra.mxu0 0.0
      %446 = vmatprep.subr.mxu0 0.0
      %447 = vmatpush1.msra.mxu0 0.0
      %448 = vmatprep.subr.mxu0 0.0
      %449 = vmatpush1.msra.mxu0 0.0
      %450 = vmatprep.subr.mxu0 0.0
      %451 = vmatpush1.msra.mxu0 0.0
      %452 = vmatprep.subr.mxu0 0.0
      %453 = vmatpush1.msra.mxu0 0.0
      %454 = vmatprep.subr.mxu0 0.0
      %455 = vmatpush1.msra.mxu0 0.0
      %456 = vmatprep.subr.mxu0 0.0
      %457 = vmatpush1.msra.mxu0 0.0
      %458 = vmatprep.subr.mxu0 0.0
      %459 = vmatpush1.msra.mxu0 0.0
      %460 = vmatprep.mubr.f32.mxu0 0.0
      %461 = vmatmul.mubr.f32.gmra.mrb[0].mxu0 %v349
      %v462 = vpop.f32.mrb[0].mxu0
      %v463 = vadd.f32 %v345, %v462
      %v464 = vpop.f32.mrb[0].mxu0
      %465 = vmatprep.mubr.f32.mxu0 0.0
      %466 = vmatmul.mubr.f32.gmra.mrb[0].mxu0 %v352
      %v467 = vpop.f32.mrb[0].mxu0
      %v468 = vadd.f32 %v345, %v467
      %v469 = vpop.f32.mrb[0].mxu0
      %470 = vmatprep.mubr.f32.mxu0 0.0
      %471 = vmatmul.mubr.f32.gmra.mrb[0].mxu0 %v355
      %v472 = vpop.f32.mrb[0].mxu0
      %v473 = vadd.f32 %v345, %v472
      %v474 = vpop.f32.mrb[0].mxu0
      %475 = vmatprep.mubr.f32.mxu0 0.0
      %476 = vmatmul.mubr.f32.gmra.mrb[0].mxu0 %v358
      %v477 = vpop.f32.mrb[0].mxu0
      %v478 = vadd.f32 %v345, %v477
      %v479 = vpop.f32.mrb[0].mxu0
      %480 = vmatprep.mubr.f32.mxu0 0.0
      %481 = vmatmul.mubr.f32.gmra.mrb[0].mxu0 %v361
      %v482 = vpop.f32.mrb[0].mxu0
      %v483 = vadd.f32 %v345, %v482
      %v484 = vpop.f32.mrb[0].mxu0
      %485 = vmatprep.mubr.f32.mxu0 0.0
      %486 = vmatmul.mubr.f32.gmra.mrb[0].mxu0 %v364
      %v487 = vpop.f32.mrb[0].mxu0
      %v488 = vadd.f32 %v345, %v487
      %v489 = vpop.f32.mrb[0].mxu0
      %490 = vmatprep.mubr.f32.mxu0 0.0
      %491 = vmatmul.mubr.f32.gmra.mrb[0].mxu0 %v367
      %v492 = vpop.f32.mrb[0].mxu0
      %v493 = vadd.f32 %v345, %v492
      %v494 = vpop.f32.mrb[0].mxu0
      %495 = vmatprep.mubr.f32.mxu0 0.0
      %496 = vmatmul.mubr.f32.gmra.mrb[0].mxu0 %v370
      %v497 = vpop.f32.mrb[0].mxu0
      %v498 = vadd.f32 %v345, %v497
      %v499 = vpop.f32.mrb[0].mxu0
      %500 = vmatprep.mubr.f32.mxu0 0.0
      %501 = vmatmul.mubr.f32.gmra.mrb[0].mxu0 %v373
      %v502 = vpop.f32.mrb[0].mxu0
      %v503 = vadd.f32 %v345, %v502
      %v504 = vpop.f32.mrb[0].mxu0
      %505 = vmatprep.mubr.f32.mxu0 0.0
      %506 = vmatmul.mubr.f32.gmra.mrb[0].mxu0 %v376
      %v507 = vpop.f32.mrb[0].mxu0
      %v508 = vadd.f32 %v345, %v507
      %v509 = vpop.f32.mrb[0].mxu0
      %510 = vmatprep.mubr.f32.mxu0 0.0
      %511 = vmatmul.mubr.f32.gmra.mrb[0].mxu0 %v379
      %v512 = vpop.f32.mrb[0].mxu0
      %v513 = vadd.f32 %v345, %v512
      %v514 = vpop.f32.mrb[0].mxu0
      %515 = vmatprep.mubr.f32.mxu0 0.0
      %516 = vmatmul.mubr.f32.gmra.mrb[0].mxu0 %v382
      %v517 = vpop.f32.mrb[0].mxu0
      %v518 = vadd.f32 %v345, %v517
      %v519 = vpop.f32.mrb[0].mxu0
      %520 = vmatprep.mubr.f32.mxu0 0.0
      %521 = vmatmul.mubr.f32.gmra.mrb[0].mxu0 %v385
      %v522 = vpop.f32.mrb[0].mxu0
      %v523 = vadd.f32 %v345, %v522
      %v524 = vpop.f32.mrb[0].mxu0
      %525 = vmatprep.mubr.f32.mxu0 0.0
      %526 = vmatmul.mubr.f32.gmra.mrb[0].mxu0 %v388
      %v527 = vpop.f32.mrb[0].mxu0
      %v528 = vadd.f32 %v345, %v527
      %v529 = vpop.f32.mrb[0].mxu0
      %530 = vmatprep.mubr.f32.mxu0 0.0
      %531 = vmatmul.mubr.f32.gmra.mrb[0].mxu0 %v391
      %v532 = vpop.f32.mrb[0].mxu0
      %v533 = vadd.f32 %v345, %v532
      %v534 = vpop.f32.mrb[0].mxu0
      %535 = vmatprep.mubr.f32.mxu0 0.0
      %536 = vmatmul.mubr.f32.gmra.mrb[0].mxu0 %v394
      %v537 = vpop.f32.mrb[0].mxu0
      %v538 = vadd.f32 %v345, %v537
      %v539 = vpop.f32.mrb[0].mxu0
      %540 = vdwg.mxu0
      %v541 = vmax.f32 %v463, 0.0
      %v542 = vmax.f32 %v468, 0.0
      %v543 = vmax.f32 %v473, 0.0
      %v544 = vmax.f32 %v478, 0.0
      %v545 = vmax.f32 %v483, 0.0
      %v546 = vmax.f32 %v488, 0.0
      %v547 = vmax.f32 %v493, 0.0
      %v548 = vmax.f32 %v498, 0.0
      %v549 = vmax.f32 %v503, 0.0
      %v550 = vmax.f32 %v508, 0.0
      %v551 = vmax.f32 %v513, 0.0
      %v552 = vmax.f32 %v518, 0.0
      %v553 = vmax.f32 %v523, 0.0
      %v554 = vmax.f32 %v528, 0.0
      %v555 = vmax.f32 %v533, 0.0
      %v556 = vmax.f32 %v538, 0.0
      %v557 = vld [vmem:[%s3] sm:$0xff]
      %v558 = vld [vmem:[%s3 + $0x8] sm:$0xff]
      %v559 = vld [vmem:[%s3 + $0x10] sm:$0xff]
      %v560 = vld [vmem:[%s3 + $0x18] sm:$0xff]
      %v561 = vld [vmem:[%s4] sm:$0x1]
      %v563 = vlaneseq
      %v564 = vshrl.u32 %v563, 7
      %v565 = vsub.s32 0, %v564
      %v566 = vrot.slane %v561, %v565
      %vm568 = vcmask 261120
      %v570 = vsel %vm568, %v541, 0
      %v573 = vsel %vm568, %v542, 0
      %v576 = vsel %vm568, %v543, 0
      %v579 = vsel %vm568, %v544, 0
      %v582 = vsel %vm568, %v545, 0
      %v585 = vsel %vm568, %v546, 0
      %v588 = vsel %vm568, %v547, 0
      %v591 = vsel %vm568, %v548, 0
      %v594 = vsel %vm568, %v549, 0
      %v597 = vsel %vm568, %v550, 0
      %v600 = vsel %vm568, %v551, 0
      %v603 = vsel %vm568, %v552, 0
      %v606 = vsel %vm568, %v553, 0
      %v609 = vsel %vm568, %v554, 0
      %v612 = vsel %vm568, %v555, 0
      %v615 = vsel %vm568, %v556, 0
      %617 = vmatprep.subr.mxu0 0.0
      %618 = vmatpush1.msra.mxu0 %v557
      %619 = vmatprep.subr.mxu0 0.0
      %620 = vmatpush1.msra.mxu0 %v558
      %621 = vmatprep.subr.mxu0 0.0
      %622 = vmatpush1.msra.mxu0 %v559
      %623 = vmatprep.subr.mxu0 0.0
      %624 = vmatpush1.msra.mxu0 %v560
      %625 = vmatprep.subr.mxu0 0.0
      %626 = vmatpush1.msra.mxu0 0.0
      %627 = vmatprep.subr.mxu0 0.0
      %628 = vmatpush1.msra.mxu0 0.0
      %629 = vmatprep.subr.mxu0 0.0
      %630 = vmatpush1.msra.mxu0 0.0
      %631 = vmatprep.subr.mxu0 0.0
      %632 = vmatpush1.msra.mxu0 0.0
      %633 = vmatprep.subr.mxu0 0.0
      %634 = vmatpush1.msra.mxu0 0.0
      %635 = vmatprep.subr.mxu0 0.0
      %636 = vmatpush1.msra.mxu0 0.0
      %637 = vmatprep.subr.mxu0 0.0
      %638 = vmatpush1.msra.mxu0 0.0
      %639 = vmatprep.subr.mxu0 0.0
      %640 = vmatpush1.msra.mxu0 0.0
      %641 = vmatprep.subr.mxu0 0.0
      %642 = vmatpush1.msra.mxu0 0.0
      %643 = vmatprep.subr.mxu0 0.0
      %644 = vmatpush1.msra.mxu0 0.0
      %645 = vmatprep.subr.mxu0 0.0
      %646 = vmatpush1.msra.mxu0 0.0
      %647 = vmatprep.subr.mxu0 0.0
      %648 = vmatpush1.msra.mxu0 0.0
      %649 = vmatprep.subr.mxu0 0.0
      %650 = vmatpush1.msra.mxu0 0.0
      %651 = vmatprep.subr.mxu0 0.0
      %652 = vmatpush1.msra.mxu0 0.0
      %653 = vmatprep.subr.mxu0 0.0
      %654 = vmatpush1.msra.mxu0 0.0
      %655 = vmatprep.subr.mxu0 0.0
      %656 = vmatpush1.msra.mxu0 0.0
      %657 = vmatprep.subr.mxu0 0.0
      %658 = vmatpush1.msra.mxu0 0.0
      %659 = vmatprep.subr.mxu0 0.0
      %660 = vmatpush1.msra.mxu0 0.0
      %661 = vmatprep.subr.mxu0 0.0
      %662 = vmatpush1.msra.mxu0 0.0
      %663 = vmatprep.subr.mxu0 0.0
      %664 = vmatpush1.msra.mxu0 0.0
      %665 = vmatprep.subr.mxu0 0.0
      %666 = vmatpush1.msra.mxu0 0.0
      %667 = vmatprep.subr.mxu0 0.0
      %668 = vmatpush1.msra.mxu0 0.0
      %669 = vmatprep.subr.mxu0 0.0
      %670 = vmatpush1.msra.mxu0 0.0
      %671 = vmatprep.subr.mxu0 0.0
      %672 = vmatpush1.msra.mxu0 0.0
      %673 = vmatprep.subr.mxu0 0.0
      %674 = vmatpush1.msra.mxu0 0.0
      %675 = vmatprep.subr.mxu0 0.0
      %676 = vmatpush1.msra.mxu0 0.0
      %677 = vmatprep.subr.mxu0 0.0
      %678 = vmatpush1.msra.mxu0 0.0
      %679 = vmatprep.subr.mxu0 0.0
      %680 = vmatpush1.msra.mxu0 0.0
      %681 = vmatprep.mubr.f32.mxu0 0.0
      %682 = vmatmul.mubr.f32.gmra.mrb[0].mxu0 %v570
      %v683 = vpop.f32.mrb[0].mxu0
      %v684 = vadd.f32 %v566, %v683
      %v685 = vpop.f32.mrb[0].mxu0
      %686 = vmatprep.mubr.f32.mxu0 0.0
      %687 = vmatmul.mubr.f32.gmra.mrb[0].mxu0 %v573
      %v688 = vpop.f32.mrb[0].mxu0
      %v689 = vadd.f32 %v566, %v688
      %v690 = vpop.f32.mrb[0].mxu0
      %691 = vmatprep.mubr.f32.mxu0 0.0
      %692 = vmatmul.mubr.f32.gmra.mrb[0].mxu0 %v576
      %v693 = vpop.f32.mrb[0].mxu0
      %v694 = vadd.f32 %v566, %v693
      %v695 = vpop.f32.mrb[0].mxu0
      %696 = vmatprep.mubr.f32.mxu0 0.0
      %697 = vmatmul.mubr.f32.gmra.mrb[0].mxu0 %v579
      %v698 = vpop.f32.mrb[0].mxu0
      %v699 = vadd.f32 %v566, %v698
      %v700 = vpop.f32.mrb[0].mxu0
      %701 = vmatprep.mubr.f32.mxu0 0.0
      %702 = vmatmul.mubr.f32.gmra.mrb[0].mxu0 %v582
      %v703 = vpop.f32.mrb[0].mxu0
      %v704 = vadd.f32 %v566, %v703
      %v705 = vpop.f32.mrb[0].mxu0
      %706 = vmatprep.mubr.f32.mxu0 0.0
      %707 = vmatmul.mubr.f32.gmra.mrb[0].mxu0 %v585
      %v708 = vpop.f32.mrb[0].mxu0
      %v709 = vadd.f32 %v566, %v708
      %v710 = vpop.f32.mrb[0].mxu0
      %711 = vmatprep.mubr.f32.mxu0 0.0
      %712 = vmatmul.mubr.f32.gmra.mrb[0].mxu0 %v588
      %v713 = vpop.f32.mrb[0].mxu0
      %v714 = vadd.f32 %v566, %v713
      %v715 = vpop.f32.mrb[0].mxu0
      %716 = vmatprep.mubr.f32.mxu0 0.0
      %717 = vmatmul.mubr.f32.gmra.mrb[0].mxu0 %v591
      %v718 = vpop.f32.mrb[0].mxu0
      %v719 = vadd.f32 %v566, %v718
      %v720 = vpop.f32.mrb[0].mxu0
      %721 = vmatprep.mubr.f32.mxu0 0.0
      %722 = vmatmul.mubr.f32.gmra.mrb[0].mxu0 %v594
      %v723 = vpop.f32.mrb[0].mxu0
      %v724 = vadd.f32 %v566, %v723
      %v725 = vpop.f32.mrb[0].mxu0
      %726 = vmatprep.mubr.f32.mxu0 0.0
      %727 = vmatmul.mubr.f32.gmra.mrb[0].mxu0 %v597
      %v728 = vpop.f32.mrb[0].mxu0
      %v729 = vadd.f32 %v566, %v728
      %v730 = vpop.f32.mrb[0].mxu0
      %731 = vmatprep.mubr.f32.mxu0 0.0
      %732 = vmatmul.mubr.f32.gmra.mrb[0].mxu0 %v600
      %v733 = vpop.f32.mrb[0].mxu0
      %v734 = vadd.f32 %v566, %v733
      %v735 = vpop.f32.mrb[0].mxu0
      %736 = vmatprep.mubr.f32.mxu0 0.0
      %737 = vmatmul.mubr.f32.gmra.mrb[0].mxu0 %v603
      %v738 = vpop.f32.mrb[0].mxu0
      %v739 = vadd.f32 %v566, %v738
      %v740 = vpop.f32.mrb[0].mxu0
      %741 = vmatprep.mubr.f32.mxu0 0.0
      %742 = vmatmul.mubr.f32.gmra.mrb[0].mxu0 %v606
      %v743 = vpop.f32.mrb[0].mxu0
      %v744 = vadd.f32 %v566, %v743
      %v745 = vpop.f32.mrb[0].mxu0
      %746 = vmatprep.mubr.f32.mxu0 0.0
      %747 = vmatmul.mubr.f32.gmra.mrb[0].mxu0 %v609
      %v748 = vpop.f32.mrb[0].mxu0
      %v749 = vadd.f32 %v566, %v748
      %v750 = vpop.f32.mrb[0].mxu0
      %751 = vmatprep.mubr.f32.mxu0 0.0
      %752 = vmatmul.mubr.f32.gmra.mrb[0].mxu0 %v612
      %v753 = vpop.f32.mrb[0].mxu0
      %v754 = vadd.f32 %v566, %v753
      %v755 = vpop.f32.mrb[0].mxu0
      %756 = vmatprep.mubr.f32.mxu0 0.0
      %757 = vmatmul.mubr.f32.gmra.mrb[0].mxu0 %v615
      %v758 = vpop.f32.mrb[0].mxu0
      %v759 = vadd.f32 %v566, %v758
      %v760 = vpop.f32.mrb[0].mxu0
      %761 = vdwg.mxu0
      %v762 = vmax.f32 %v684, 0.0
      %v763 = vmax.f32 %v689, 0.0
      %v764 = vmax.f32 %v694, 0.0
      %v765 = vmax.f32 %v699, 0.0
      %v766 = vmax.f32 %v704, 0.0
      %v767 = vmax.f32 %v709, 0.0
      %v768 = vmax.f32 %v714, 0.0
      %v769 = vmax.f32 %v719, 0.0
      %v770 = vmax.f32 %v724, 0.0
      %v771 = vmax.f32 %v729, 0.0
      %v772 = vmax.f32 %v734, 0.0
      %v773 = vmax.f32 %v739, 0.0
      %v774 = vmax.f32 %v744, 0.0
      %v775 = vmax.f32 %v749, 0.0
      %v776 = vmax.f32 %v754, 0.0
      %v777 = vmax.f32 %v759, 0.0
      %v778 = vld [vmem:[%s5] sm:$0xff]
      %v779 = vld [vmem:[%s5 + $0x8] sm:$0xff]
      %v780 = vld [vmem:[%s5 + $0x10] sm:$0xff]
      %v781 = vld [vmem:[%s5 + $0x18] sm:$0xff]
      %v782 = vld [vmem:[%s6] sm:$0x1]
      %v784 = vlaneseq
      %v785 = vshrl.u32 %v784, 7
      %v786 = vsub.s32 0, %v785
      %v787 = vrot.slane %v782, %v786
      %v790 = vsel %vm568, %v762, 0
      %v793 = vsel %vm568, %v763, 0
      %v796 = vsel %vm568, %v764, 0
      %v799 = vsel %vm568, %v765, 0
      %v802 = vsel %vm568, %v766, 0
      %v805 = vsel %vm568, %v767, 0
      %v808 = vsel %vm568, %v768, 0
      %v811 = vsel %vm568, %v769, 0
      %v814 = vsel %vm568, %v770, 0
      %v817 = vsel %vm568, %v771, 0
      %v820 = vsel %vm568, %v772, 0
      %v823 = vsel %vm568, %v773, 0
      %v826 = vsel %vm568, %v774, 0
      %v829 = vsel %vm568, %v775, 0
      %v832 = vsel %vm568, %v776, 0
      %v835 = vsel %vm568, %v777, 0
      %837 = vmatprep.subr.mxu0 0.0
      %838 = vmatpush1.msra.mxu0 %v778
      %839 = vmatprep.subr.mxu0 0.0
      %840 = vmatpush1.msra.mxu0 %v779
      %841 = vmatprep.subr.mxu0 0.0
      %842 = vmatpush1.msra.mxu0 %v780
      %843 = vmatprep.subr.mxu0 0.0
      %844 = vmatpush1.msra.mxu0 %v781
      %845 = vmatprep.subr.mxu0 0.0
      %846 = vmatpush1.msra.mxu0 0.0
      %847 = vmatprep.subr.mxu0 0.0
      %848 = vmatpush1.msra.mxu0 0.0
      %849 = vmatprep.subr.mxu0 0.0
      %850 = vmatpush1.msra.mxu0 0.0
      %851 = vmatprep.subr.mxu0 0.0
      %852 = vmatpush1.msra.mxu0 0.0
      %853 = vmatprep.subr.mxu0 0.0
      %854 = vmatpush1.msra.mxu0 0.0
      %855 = vmatprep.subr.mxu0 0.0
      %856 = vmatpush1.msra.mxu0 0.0
      %857 = vmatprep.subr.mxu0 0.0
      %858 = vmatpush1.msra.mxu0 0.0
      %859 = vmatprep.subr.mxu0 0.0
      %860 = vmatpush1.msra.mxu0 0.0
      %861 = vmatprep.subr.mxu0 0.0
      %862 = vmatpush1.msra.mxu0 0.0
      %863 = vmatprep.subr.mxu0 0.0
      %864 = vmatpush1.msra.mxu0 0.0
      %865 = vmatprep.subr.mxu0 0.0
      %866 = vmatpush1.msra.mxu0 0.0
      %867 = vmatprep.subr.mxu0 0.0
      %868 = vmatpush1.msra.mxu0 0.0
      %869 = vmatprep.subr.mxu0 0.0
      %870 = vmatpush1.msra.mxu0 0.0
      %871 = vmatprep.subr.mxu0 0.0
      %872 = vmatpush1.msra.mxu0 0.0
      %873 = vmatprep.subr.mxu0 0.0
      %874 = vmatpush1.msra.mxu0 0.0
      %875 = vmatprep.subr.mxu0 0.0
      %876 = vmatpush1.msra.mxu0 0.0
      %877 = vmatprep.subr.mxu0 0.0
      %878 = vmatpush1.msra.mxu0 0.0
      %879 = vmatprep.subr.mxu0 0.0
      %880 = vmatpush1.msra.mxu0 0.0
      %881 = vmatprep.subr.mxu0 0.0
      %882 = vmatpush1.msra.mxu0 0.0
      %883 = vmatprep.subr.mxu0 0.0
      %884 = vmatpush1.msra.mxu0 0.0
      %885 = vmatprep.subr.mxu0 0.0
      %886 = vmatpush1.msra.mxu0 0.0
      %887 = vmatprep.subr.mxu0 0.0
      %888 = vmatpush1.msra.mxu0 0.0
      %889 = vmatprep.subr.mxu0 0.0
      %890 = vmatpush1.msra.mxu0 0.0
      %891 = vmatprep.subr.mxu0 0.0
      %892 = vmatpush1.msra.mxu0 0.0
      %893 = vmatprep.subr.mxu0 0.0
      %894 = vmatpush1.msra.mxu0 0.0
      %895 = vmatprep.subr.mxu0 0.0
      %896 = vmatpush1.msra.mxu0 0.0
      %897 = vmatprep.subr.mxu0 0.0
      %898 = vmatpush1.msra.mxu0 0.0
      %899 = vmatprep.subr.mxu0 0.0
      %900 = vmatpush1.msra.mxu0 0.0
      %901 = vmatprep.mubr.f32.mxu0 0.0
      %902 = vmatmul.mubr.f32.gmra.mrb[0].mxu0 %v790
      %v903 = vpop.f32.mrb[0].mxu0
      %v904 = vadd.f32 %v787, %v903
      %v905 = vpop.f32.mrb[0].mxu0
      %906 = vmatprep.mubr.f32.mxu0 0.0
      %907 = vmatmul.mubr.f32.gmra.mrb[0].mxu0 %v793
      %v908 = vpop.f32.mrb[0].mxu0
      %v909 = vadd.f32 %v787, %v908
      %v910 = vpop.f32.mrb[0].mxu0
      %911 = vmatprep.mubr.f32.mxu0 0.0
      %912 = vmatmul.mubr.f32.gmra.mrb[0].mxu0 %v796
      %v913 = vpop.f32.mrb[0].mxu0
      %v914 = vadd.f32 %v787, %v913
      %v915 = vpop.f32.mrb[0].mxu0
      %916 = vmatprep.mubr.f32.mxu0 0.0
      %917 = vmatmul.mubr.f32.gmra.mrb[0].mxu0 %v799
      %v918 = vpop.f32.mrb[0].mxu0
      %v919 = vadd.f32 %v787, %v918
      %v920 = vpop.f32.mrb[0].mxu0
      %921 = vmatprep.mubr.f32.mxu0 0.0
      %922 = vmatmul.mubr.f32.gmra.mrb[0].mxu0 %v802
      %v923 = vpop.f32.mrb[0].mxu0
      %v924 = vadd.f32 %v787, %v923
      %v925 = vpop.f32.mrb[0].mxu0
      %926 = vmatprep.mubr.f32.mxu0 0.0
      %927 = vmatmul.mubr.f32.gmra.mrb[0].mxu0 %v805
      %v928 = vpop.f32.mrb[0].mxu0
      %v929 = vadd.f32 %v787, %v928
      %v930 = vpop.f32.mrb[0].mxu0
      %931 = vmatprep.mubr.f32.mxu0 0.0
      %932 = vmatmul.mubr.f32.gmra.mrb[0].mxu0 %v808
      %v933 = vpop.f32.mrb[0].mxu0
      %v934 = vadd.f32 %v787, %v933
      %v935 = vpop.f32.mrb[0].mxu0
      %936 = vmatprep.mubr.f32.mxu0 0.0
      %937 = vmatmul.mubr.f32.gmra.mrb[0].mxu0 %v811
      %v938 = vpop.f32.mrb[0].mxu0
      %v939 = vadd.f32 %v787, %v938
      %v940 = vpop.f32.mrb[0].mxu0
      %941 = vmatprep.mubr.f32.mxu0 0.0
      %942 = vmatmul.mubr.f32.gmra.mrb[0].mxu0 %v814
      %v943 = vpop.f32.mrb[0].mxu0
      %v944 = vadd.f32 %v787, %v943
      %v945 = vpop.f32.mrb[0].mxu0
      %946 = vmatprep.mubr.f32.mxu0 0.0
      %947 = vmatmul.mubr.f32.gmra.mrb[0].mxu0 %v817
      %v948 = vpop.f32.mrb[0].mxu0
      %v949 = vadd.f32 %v787, %v948
      %v950 = vpop.f32.mrb[0].mxu0
      %951 = vmatprep.mubr.f32.mxu0 0.0
      %952 = vmatmul.mubr.f32.gmra.mrb[0].mxu0 %v820
      %v953 = vpop.f32.mrb[0].mxu0
      %v954 = vadd.f32 %v787, %v953
      %v955 = vpop.f32.mrb[0].mxu0
      %956 = vmatprep.mubr.f32.mxu0 0.0
      %957 = vmatmul.mubr.f32.gmra.mrb[0].mxu0 %v823
      %v958 = vpop.f32.mrb[0].mxu0
      %v959 = vadd.f32 %v787, %v958
      %v960 = vpop.f32.mrb[0].mxu0
      %961 = vmatprep.mubr.f32.mxu0 0.0
      %962 = vmatmul.mubr.f32.gmra.mrb[0].mxu0 %v826
      %v963 = vpop.f32.mrb[0].mxu0
      %v964 = vadd.f32 %v787, %v963
      %v965 = vpop.f32.mrb[0].mxu0
      %966 = vmatprep.mubr.f32.mxu0 0.0
      %967 = vmatmul.mubr.f32.gmra.mrb[0].mxu0 %v829
      %v968 = vpop.f32.mrb[0].mxu0
      %v969 = vadd.f32 %v787, %v968
      %v970 = vpop.f32.mrb[0].mxu0
      %971 = vmatprep.mubr.f32.mxu0 0.0
      %972 = vmatmul.mubr.f32.gmra.mrb[0].mxu0 %v832
      %v973 = vpop.f32.mrb[0].mxu0
      %v974 = vadd.f32 %v787, %v973
      %v975 = vpop.f32.mrb[0].mxu0
      %976 = vmatprep.mubr.f32.mxu0 0.0
      %977 = vmatmul.mubr.f32.gmra.mrb[0].mxu0 %v835
      %v978 = vpop.f32.mrb[0].mxu0
      %v979 = vadd.f32 %v787, %v978
      %v980 = vpop.f32.mrb[0].mxu0
      %981 = vdwg.mxu0
      %vm982 = vcmask 31744
      %v983 = vsel %vm982, %v904, -inf
      %984 = vmax.xlane.f32.xlu0 %v983
      %v985 = vpop.xlane.xlu0 %984
      %v986 = vsel %vm982, %v909, -inf
      %987 = vmax.xlane.f32.xlu0 %v986
      %v988 = vpop.xlane.xlu0 %987
      %v989 = vsel %vm982, %v914, -inf
      %990 = vmax.xlane.f32.xlu0 %v989
      %v991 = vpop.xlane.xlu0 %990
      %v992 = vsel %vm982, %v919, -inf
      %993 = vmax.xlane.f32.xlu0 %v992
      %v994 = vpop.xlane.xlu0 %993
      %v995 = vsel %vm982, %v924, -inf
      %996 = vmax.xlane.f32.xlu0 %v995
      %v997 = vpop.xlane.xlu0 %996
      %v998 = vsel %vm982, %v929, -inf
      %999 = vmax.xlane.f32.xlu0 %v998
      %v1000 = vpop.xlane.xlu0 %999
      %v1001 = vsel %vm982, %v934, -inf
      %1002 = vmax.xlane.f32.xlu0 %v1001
      %v1003 = vpop.xlane.xlu0 %1002
      %v1004 = vsel %vm982, %v939, -inf
      %1005 = vmax.xlane.f32.xlu0 %v1004
      %v1006 = vpop.xlane.xlu0 %1005
      %v1007 = vsel %vm982, %v944, -inf
      %1008 = vmax.xlane.f32.xlu0 %v1007
      %v1009 = vpop.xlane.xlu0 %1008
      %v1010 = vsel %vm982, %v949, -inf
      %1011 = vmax.xlane.f32.xlu0 %v1010
      %v1012 = vpop.xlane.xlu0 %1011
      %v1013 = vsel %vm982, %v954, -inf
      %1014 = vmax.xlane.f32.xlu0 %v1013
      %v1015 = vpop.xlane.xlu0 %1014
      %v1016 = vsel %vm982, %v959, -inf
      %1017 = vmax.xlane.f32.xlu0 %v1016
      %v1018 = vpop.xlane.xlu0 %1017
      %v1019 = vsel %vm982, %v964, -inf
      %1020 = vmax.xlane.f32.xlu0 %v1019
      %v1021 = vpop.xlane.xlu0 %1020
      %v1022 = vsel %vm982, %v969, -inf
      %1023 = vmax.xlane.f32.xlu0 %v1022
      %v1024 = vpop.xlane.xlu0 %1023
      %v1025 = vsel %vm982, %v974, -inf
      %1026 = vmax.xlane.f32.xlu0 %v1025
      %v1027 = vpop.xlane.xlu0 %1026
      %v1028 = vsel %vm982, %v979, -inf
      %1029 = vmax.xlane.f32.xlu0 %v1028
      %v1030 = vpop.xlane.xlu0 %1029
      %v1031 = vsub.f32 %v904, %v985
      %v1032 = vsub.f32 %v909, %v988
      %v1033 = vsub.f32 %v914, %v991
      %v1034 = vsub.f32 %v919, %v994
      %v1035 = vsub.f32 %v924, %v997
      %v1036 = vsub.f32 %v929, %v1000
      %v1037 = vsub.f32 %v934, %v1003
      %v1038 = vsub.f32 %v939, %v1006
      %v1039 = vsub.f32 %v944, %v1009
      %v1040 = vsub.f32 %v949, %v1012
      %v1041 = vsub.f32 %v954, %v1015
      %v1042 = vsub.f32 %v959, %v1018
      %v1043 = vsub.f32 %v964, %v1021
      %v1044 = vsub.f32 %v969, %v1024
      %v1045 = vsub.f32 %v974, %v1027
      %v1046 = vsub.f32 %v979, %v1030
      %v1047 = vmul.f32 %v1031, 1.442695
      %v1048 = vpow.pop %v1047
      %v1049 = vmul.f32 %v1032, 1.442695
      %v1050 = vpow.pop %v1049
      %v1051 = vmul.f32 %v1033, 1.442695
      %v1052 = vpow.pop %v1051
      %v1053 = vmul.f32 %v1034, 1.442695
      %v1054 = vpow.pop %v1053
      %v1055 = vmul.f32 %v1035, 1.442695
      %v1056 = vpow.pop %v1055
      %v1057 = vmul.f32 %v1036, 1.442695
      %v1058 = vpow.pop %v1057
      %v1059 = vmul.f32 %v1037, 1.442695
      %v1060 = vpow.pop %v1059
      %v1061 = vmul.f32 %v1038, 1.442695
      %v1062 = vpow.pop %v1061
      %v1063 = vmul.f32 %v1039, 1.442695
      %v1064 = vpow.pop %v1063
      %v1065 = vmul.f32 %v1040, 1.442695
      %v1066 = vpow.pop %v1065
      %v1067 = vmul.f32 %v1041, 1.442695
      %v1068 = vpow.pop %v1067
      %v1069 = vmul.f32 %v1042, 1.442695
      %v1070 = vpow.pop %v1069
      %v1071 = vmul.f32 %v1043, 1.442695
      %v1072 = vpow.pop %v1071
      %v1073 = vmul.f32 %v1044, 1.442695
      %v1074 = vpow.pop %v1073
      %v1075 = vmul.f32 %v1045, 1.442695
      %v1076 = vpow.pop %v1075
      %v1077 = vmul.f32 %v1046, 1.442695
      %v1078 = vpow.pop %v1077
      %v1079 = vsel %vm982, %v1048, 0.0
      %1080 = vadd.xlane.f32.xlu0 %v1079
      %v1081 = vpop.xlane.xlu0 %1080
      %v1082 = vsel %vm982, %v1050, 0.0
      %1083 = vadd.xlane.f32.xlu0 %v1082
      %v1084 = vpop.xlane.xlu0 %1083
      %v1085 = vsel %vm982, %v1052, 0.0
      %1086 = vadd.xlane.f32.xlu0 %v1085
      %v1087 = vpop.xlane.xlu0 %1086
      %v1088 = vsel %vm982, %v1054, 0.0
      %1089 = vadd.xlane.f32.xlu0 %v1088
      %v1090 = vpop.xlane.xlu0 %1089
      %v1091 = vsel %vm982, %v1056, 0.0
      %1092 = vadd.xlane.f32.xlu0 %v1091
      %v1093 = vpop.xlane.xlu0 %1092
      %v1094 = vsel %vm982, %v1058, 0.0
      %1095 = vadd.xlane.f32.xlu0 %v1094
      %v1096 = vpop.xlane.xlu0 %1095
      %v1097 = vsel %vm982, %v1060, 0.0
      %1098 = vadd.xlane.f32.xlu0 %v1097
      %v1099 = vpop.xlane.xlu0 %1098
      %v1100 = vsel %vm982, %v1062, 0.0
      %1101 = vadd.xlane.f32.xlu0 %v1100
      %v1102 = vpop.xlane.xlu0 %1101
      %v1103 = vsel %vm982, %v1064, 0.0
      %1104 = vadd.xlane.f32.xlu0 %v1103
      %v1105 = vpop.xlane.xlu0 %1104
      %v1106 = vsel %vm982, %v1066, 0.0
      %1107 = vadd.xlane.f32.xlu0 %v1106
      %v1108 = vpop.xlane.xlu0 %1107
      %v1109 = vsel %vm982, %v1068, 0.0
      %1110 = vadd.xlane.f32.xlu0 %v1109
      %v1111 = vpop.xlane.xlu0 %1110
      %v1112 = vsel %vm982, %v1070, 0.0
      %1113 = vadd.xlane.f32.xlu0 %v1112
      %v1114 = vpop.xlane.xlu0 %1113
      %v1115 = vsel %vm982, %v1072, 0.0
      %1116 = vadd.xlane.f32.xlu0 %v1115
      %v1117 = vpop.xlane.xlu0 %1116
      %v1118 = vsel %vm982, %v1074, 0.0
      %1119 = vadd.xlane.f32.xlu0 %v1118
      %v1120 = vpop.xlane.xlu0 %1119
      %v1121 = vsel %vm982, %v1076, 0.0
      %1122 = vadd.xlane.f32.xlu0 %v1121
      %v1123 = vpop.xlane.xlu0 %1122
      %v1124 = vsel %vm982, %v1078, 0.0
      %1125 = vadd.xlane.f32.xlu0 %v1124
      %v1126 = vpop.xlane.xlu0 %1125
      %v1127 = vrcp.pop %v1081
      %v1128 = vmul.f32 %v1048, %v1127
      %v1129 = vrcp.pop %v1084
      %v1130 = vmul.f32 %v1050, %v1129
      %v1131 = vrcp.pop %v1087
      %v1132 = vmul.f32 %v1052, %v1131
      %v1133 = vrcp.pop %v1090
      %v1134 = vmul.f32 %v1054, %v1133
      %v1135 = vrcp.pop %v1093
      %v1136 = vmul.f32 %v1056, %v1135
      %v1137 = vrcp.pop %v1096
      %v1138 = vmul.f32 %v1058, %v1137
      %v1139 = vrcp.pop %v1099
      %v1140 = vmul.f32 %v1060, %v1139
      %v1141 = vrcp.pop %v1102
      %v1142 = vmul.f32 %v1062, %v1141
      %v1143 = vrcp.pop %v1105
      %v1144 = vmul.f32 %v1064, %v1143
      %v1145 = vrcp.pop %v1108
      %v1146 = vmul.f32 %v1066, %v1145
      %v1147 = vrcp.pop %v1111
      %v1148 = vmul.f32 %v1068, %v1147
      %v1149 = vrcp.pop %v1114
      %v1150 = vmul.f32 %v1070, %v1149
      %v1151 = vrcp.pop %v1117
      %v1152 = vmul.f32 %v1072, %v1151
      %v1153 = vrcp.pop %v1120
      %v1154 = vmul.f32 %v1074, %v1153
      %v1155 = vrcp.pop %v1123
      %v1156 = vmul.f32 %v1076, %v1155
      %v1157 = vrcp.pop %v1126
      %v1158 = vmul.f32 %v1078, %v1157
      %1159 = vst.msk [vmem:[%s315] sm:$0xff] %vm982, %v904
      %1160 = vst.msk [vmem:[%s315 + $0x8] sm:$0xff] %vm982, %v909
      %1161 = vst.msk [vmem:[%s315 + $0x10] sm:$0xff] %vm982, %v914
      %1162 = vst.msk [vmem:[%s315 + $0x18] sm:$0xff] %vm982, %v919
      %1163 = vst.msk [vmem:[%s315 + $0x20] sm:$0xff] %vm982, %v924
      %1164 = vst.msk [vmem:[%s315 + $0x28] sm:$0xff] %vm982, %v929
      %1165 = vst.msk [vmem:[%s315 + $0x30] sm:$0xff] %vm982, %v934
      %1166 = vst.msk [vmem:[%s315 + $0x38] sm:$0xff] %vm982, %v939
      %1167 = vst.msk [vmem:[%s315 + $0x40] sm:$0xff] %vm982, %v944
      %1168 = vst.msk [vmem:[%s315 + $0x48] sm:$0xff] %vm982, %v949
      %1169 = vst.msk [vmem:[%s315 + $0x50] sm:$0xff] %vm982, %v954
      %1170 = vst.msk [vmem:[%s315 + $0x58] sm:$0xff] %vm982, %v959
      %1171 = vst.msk [vmem:[%s315 + $0x60] sm:$0xff] %vm982, %v964
      %1172 = vst.msk [vmem:[%s315 + $0x68] sm:$0xff] %vm982, %v969
      %1173 = vst.msk [vmem:[%s315 + $0x70] sm:$0xff] %vm982, %v974
      %1174 = vst.msk [vmem:[%s315 + $0x78] sm:$0xff] %vm982, %v979
      %1175 = vst.msk [vmem:[%s321] sm:$0xff] %vm982, %v1128
      %1176 = vst.msk [vmem:[%s321 + $0x8] sm:$0xff] %vm982, %v1130
      %1177 = vst.msk [vmem:[%s321 + $0x10] sm:$0xff] %vm982, %v1132
      %1178 = vst.msk [vmem:[%s321 + $0x18] sm:$0xff] %vm982, %v1134
      %1179 = vst.msk [vmem:[%s321 + $0x20] sm:$0xff] %vm982, %v1136
      %1180 = vst.msk [vmem:[%s321 + $0x28] sm:$0xff] %vm982, %v1138
      %1181 = vst.msk [vmem:[%s321 + $0x30] sm:$0xff] %vm982, %v1140
      %1182 = vst.msk [vmem:[%s321 + $0x38] sm:$0xff] %vm982, %v1142
      %1183 = vst.msk [vmem:[%s321 + $0x40] sm:$0xff] %vm982, %v1144
      %1184 = vst.msk [vmem:[%s321 + $0x48] sm:$0xff] %vm982, %v1146
      %1185 = vst.msk [vmem:[%s321 + $0x50] sm:$0xff] %vm982, %v1148
      %1186 = vst.msk [vmem:[%s321 + $0x58] sm:$0xff] %vm982, %v1150
      %1187 = vst.msk [vmem:[%s321 + $0x60] sm:$0xff] %vm982, %v1152
      %1188 = vst.msk [vmem:[%s321 + $0x68] sm:$0xff] %vm982, %v1154
      %1189 = vst.msk [vmem:[%s321 + $0x70] sm:$0xff] %vm982, %v1156
      %1190 = vst.msk [vmem:[%s321 + $0x78] sm:$0xff] %vm982, %v1158
      %s1191 = smul.u32 16, %s20
      %p1192 = scmp.lt.s32.totalorder %s1191, 31
      %s1193 = scalar_select %p1192, %s1191, 31
      %s1194 = smul.addr %s1193, 8
      %s1195 = scalar_lea.vmem %s7, %s1194
      %s1196 = smul.u32 16, %s20
      %p1197 = scmp.lt.s32.totalorder %s1196, 31
      %s1198 = scalar_select %p1197, %s1196, 31
      %s1199 = smul.addr %s1198, 8
      %s1200 = scalar_lea.vmem %s8, %s1199
      // Predicated region
      $region49: #{moe_router_forward.1} parent=47 // pred_check
        %p1201 = pneg %p190
      $region50: #{moe_router_forward.1} parent=47 // pred_check_branch
        %1203 = sbr.rel (%p1201) target = $region52
      $region51: #{moe_router_forward.1} parent=47 // pred_region
        %s1204 = smul.u32 16, %s20
      $region52: #{moe_router_forward.1} parent=47 // pred_fallthru
        _
      // Predicated region
      $region53: #{moe_router_forward.1} parent=47 // pred_check
        %p1205 = pneg %p216
      $region54: #{moe_router_forward.1} parent=47 // pred_check_branch
        %1207 = sbr.rel (%p1205) target = $region56
      $region55: #{moe_router_forward.1} parent=47 // pred_region
        %s1208 = smul.u32 16, %s20
      $region56: #{moe_router_forward.1} parent=47 // pred_fallthru
        _
    $region48: #{moe_router_forward.1} parent=5 // pred_fallthru
      _
    %p1209 = scmp.le.s32.totalorder 2, %s15
    // Predicated region
    $region57: #{moe_router_forward.1} parent=5 // pred_check
      %p1210 = pneg %p1209
    $region58: #{moe_router_forward.1} parent=5 // pred_check_branch
      %1212 = sbr.rel (%p1210) target = $region60
    $region59: #{moe_router_forward.1} parent=5 // pred_region
      %s1213 = ssub.s32 %s15, 2
      // Predicated region
      $region61: #{moe_router_forward.1} parent=59 // pred_check
        %p1214 = pneg %p196
      $region62: #{moe_router_forward.1} parent=59 // pred_check_branch
        %1216 = sbr.rel (%p1214) target = $region64
      $region63: #{moe_router_forward.1} parent=59 // pred_region
        %s1217 = smul.u32 16, %s21
        %p1218 = scmp.lt.s32.totalorder %s1217, 31
        %s1219 = scalar_select %p1218, %s1217, 31
        %s1220 = smul.addr %s1219, 8
        %s1221 = scalar_lea.vmem %s7, %s1220
      $region64: #{moe_router_forward.1} parent=59 // pred_fallthru
        _
      // Predicated region
      $region65: #{moe_router_forward.1} parent=59 // pred_check
        %p1222 = pneg %p222
      $region66: #{moe_router_forward.1} parent=59 // pred_check_branch
        %1224 = sbr.rel (%p1222) target = $region68
      $region67: #{moe_router_forward.1} parent=59 // pred_region
        %s1225 = smul.u32 16, %s21
        %p1226 = scmp.lt.s32.totalorder %s1225, 31
        %s1227 = scalar_select %p1226, %s1225, 31
        %s1228 = smul.addr %s1227, 8
        %s1229 = scalar_lea.vmem %s8, %s1228
      $region68: #{moe_router_forward.1} parent=59 // pred_fallthru
        _
    $region60: #{moe_router_forward.1} parent=5 // pred_fallthru
      _
  $region6: #{moe_router_forward.1} parent=0 // loop_footer
    %s19 = sadd.s32 1, %s15
  $region7: #{moe_router_forward.1} parent=0 // loop_footer_branch
    %14 = sbr.rel target = $region3
  $region8: #{moe_router_forward.1} parent=0 // loop_exit
    _

</llo_original>
